<compile_context>
chip_gen: v7x
topology: tpu7x:2x2x1
jax: 0.10.0
libtpu: 0.0.40
codegen_flags: <defaults>
</compile_context>

<pallas_src>
import functools

import jax
import jax.numpy as jnp
from jax.experimental import pallas as pl
from jax.experimental.pallas import tpu as pltpu


def _ce_mixup_kernel(inp_ref, tgt_ref, lam_ref, out_ref, *, batch, tile_b):
    # inp_ref: (TB, C) logits (any float dtype), tgt_ref: (TB, 1) i32,
    # lam_ref: (TB, 1) f32, out_ref: (8, 1) f32 per-tile partial sum.
    x = inp_ref[...].astype(jnp.float32)                   # upcast in-kernel
    tb, c = x.shape

    # Stabilized logsumexp (exp/log hit the EUP slot, sums the XLU slot).
    m = jnp.max(x, axis=1, keepdims=True)                          # (TB, 1)
    lse = jnp.log(jnp.sum(jnp.exp(x - m), axis=1, keepdims=True))  # (TB, 1)

    # wsum = (1-lam)/C * sum_c(x) + lam * x[tgt]   (no (TB,C) weight tensor).
    tgt = tgt_ref[...]                                             # (TB, 1) i32
    lam = lam_ref[...]                                             # (TB, 1) f32
    class_ids = jax.lax.broadcasted_iota(jnp.int32, (tb, c), 1)
    x_sum = jnp.sum(x, axis=1, keepdims=True)                      # (TB, 1)
    x_tgt = jnp.sum(jnp.where(class_ids == tgt, x, 0.0),
                    axis=1, keepdims=True)                         # (TB, 1)
    smooth = (1.0 - lam) * jnp.float32(1.0 / c)                    # (TB, 1)
    wsum = smooth * x_sum + lam * x_tgt

    # Collapsed per-row cross entropy with mixup label smoothing.
    per_row = (m + lse) - wsum                                     # (TB, 1)

    # Mask rows past the true batch (partial last block reads undefined data;
    # jnp.where discards any NaN/Inf those rows may have produced).
    row_ids = pl.program_id(0) * tile_b + jax.lax.broadcasted_iota(
        jnp.int32, (tb, 1), 0)
    per_row = jnp.where(row_ids < batch, per_row, 0.0)

    # One partial sum per tile -> 32-byte writeback into an (8,1) aligned block.
    part = jnp.sum(per_row)
    out_rows = jax.lax.broadcasted_iota(jnp.int32, (8, 1), 0)
    out_ref[...] = jnp.where(out_rows == 0, part, 0.0)


def _round_up(x, m):
    return ((x + m - 1) // m) * m


def _vmem_budget_bytes():
    # ~2/3 of physical VMEM: ~42 MiB on v7x (64 MiB), ~85 MiB on v5e/v6e (128 MiB).
    try:
        phys = int(pltpu.get_tpu_info().vmem_capacity_bytes)
    except Exception:
        phys = 64 * 1024 * 1024          # v7x-safe fallback
    return max(16 * 1024 * 1024, min(phys * 2 // 3, 96 * 1024 * 1024))


def _pick_tile_b(batch, num_classes, itemsize, budget):
    # Honest per-row cost: double-buffered input tile + ~5 full-width
    # intermediates (f32 upcast, exp(x-m), class iota, select, slack).
    row_align = 16 if itemsize < 4 else 8   # sub-32-bit dtypes pack rows in sublanes
    per_row_bytes = 2 * num_classes * itemsize + 5 * num_classes * 4
    tb = max(row_align, (budget // per_row_bytes) // row_align * row_align)
    tb = min(tb, 2048)
    if tb >= batch:
        if batch >= 256:
            # Whole batch fits one tile; split into 2 so the "parallel" batch
            # axis can feed both v7x TensorCores.
            tb = _round_up(-(-batch // 2), row_align)
        else:
            tb = batch            # block dim == full array dim is always legal
    return tb


def cross_entropy_mixup(inputs, targets, s_lambda, *, tile_b=None):
    """inputs: (B, C) float (f32/bf16), targets: (B,) int, s_lambda: (B,) float -> scalar f32."""
    B, C = inputs.shape
    itemsize = jnp.dtype(inputs.dtype).itemsize

    tgt2d = targets.astype(jnp.int32).reshape(B, 1)
    lam2d = s_lambda.astype(jnp.float32).reshape(B, 1)

    budget = _vmem_budget_bytes()
    if tile_b is None:
        tile_b = _pick_tile_b(B, C, itemsize, budget)
    num_tiles = pl.cdiv(B, tile_b)

    kernel = functools.partial(_ce_mixup_kernel, batch=B, tile_b=tile_b)

    partials = pl.pallas_call(
        kernel,
        out_shape=jax.ShapeDtypeStruct((num_tiles * 8, 1), jnp.float32),
        grid=(num_tiles,),
        in_specs=[
            pl.BlockSpec((tile_b, C), lambda i: (i, 0)),   # logits tile
            pl.BlockSpec((tile_b, 1), lambda i: (i, 0)),   # targets column
            pl.BlockSpec((tile_b, 1), lambda i: (i, 0)),   # lambda column
        ],
        out_specs=pl.BlockSpec((8, 1), lambda i: (i, 0)),  # per-tile partial sum
        compiler_params=pltpu.CompilerParams(
            dimension_semantics=("parallel",),
            vmem_limit_bytes=int(budget),
        ),
    )(inputs, tgt2d, lam2d)

    # Final mean over the true batch; padded/invalid rows were masked to 0.
    return jnp.sum(partials) / jnp.float32(B)


def _reference(inputs, targets, s_lambda):
    # Pure-JAX reference mirroring the PyTorch module.
    B, C = inputs.shape
    log_probs = jax.nn.log_softmax(inputs.astype(jnp.float32), axis=1)
    onehot = jax.nn.one_hot(targets, C, dtype=jnp.float32)
    lam = s_lambda.astype(jnp.float32)[:, None]
    mixed = lam * onehot + (1.0 - lam) / C
    return jnp.mean(jnp.sum(-mixed * log_probs, axis=1))


if __name__ == "__main__":
    num_classes = 32
    batch = 8

    key = jax.random.PRNGKey(0)
    k1, k2, k3, k4, k5, k6 = jax.random.split(key, 6)
    inputs = jax.random.normal(k1, (batch, num_classes), dtype=jnp.float32)
    targets = jax.random.randint(k2, (batch,), 0, num_classes, dtype=jnp.int32)
    s_lambda = jax.random.uniform(k3, (batch,), dtype=jnp.float32)

    # f32 path
    loss = cross_entropy_mixup(inputs, targets, s_lambda)
    jax.block_until_ready(loss)
    ref = _reference(inputs, targets, s_lambda)
    assert jnp.allclose(loss, ref, atol=1e-5, rtol=1e-5), (loss, ref)

    # bf16 logits path (no wrapper-side f32 copy; kernel upcasts internally).
    inputs_bf16 = inputs.astype(jnp.bfloat16)
    loss_bf16 = cross_entropy_mixup(inputs_bf16, targets, s_lambda)
    jax.block_until_ready(loss_bf16)
    ref_bf16 = _reference(inputs_bf16, targets, s_lambda)
    assert jnp.allclose(loss_bf16, ref_bf16, atol=1e-3, rtol=1e-3), (loss_bf16, ref_bf16)

    # Non-divisible batch with a forced small tile: exercises the partial last
    # block + in-kernel row masking (no jnp.pad of the logits anymore).
    b2 = 50
    inp2 = jax.random.normal(k4, (b2, num_classes), dtype=jnp.float32)
    tgt2 = jax.random.randint(k5, (b2,), 0, num_classes, dtype=jnp.int32)
    lam2 = jax.random.uniform(k6, (b2,), dtype=jnp.float32)
    loss2 = cross_entropy_mixup(inp2, tgt2, lam2, tile_b=16)
    jax.block_until_ready(loss2)
    ref2 = _reference(inp2, tgt2, lam2)
    assert jnp.allclose(loss2, ref2, atol=1e-5, rtol=1e-5), (loss2, ref2)

    print("KERNEL_OK")
</pallas_src>

<mosaic_0001>
module attributes {stable_mosaic.version = 11 : i64} {
  func.func @_ce_mixup_kernel(%arg0: i32, %arg1: memref<8x32xf32, #tpu.memory_space<vmem>>, %arg2: memref<8x1xi32, #tpu.memory_space<vmem>>, %arg3: memref<8x1xf32, #tpu.memory_space<vmem>>, %arg4: memref<8x1xf32, #tpu.memory_space<vmem>>) attributes {dimension_semantics = [#tpu.dimension_semantics<parallel>], iteration_bounds = array<i64: 1>, scalar_prefetch = 0 : i64, scratch_operands = 0 : i64, tpu.core_type = #tpu.core_type<tc>, window_params = [{transform_indices = @transform_0, window_bounds = array<i64: 8, 32>}, {transform_indices = @transform_1, window_bounds = array<i64: 8, 1>}, {transform_indices = @transform_2, window_bounds = array<i64: 8, 1>}, {transform_indices = @transform_3, window_bounds = array<i64: 8, 1>}]} {
    %c0 = arith.constant 0 : index
    %c0_0 = arith.constant 0 : index
    %0 = vector.load %arg1[%c0, %c0_0] : memref<8x32xf32, #tpu.memory_space<vmem>>, vector<8x32xf32>
    %cst = arith.constant dense<0xFF800000> : vector<8xf32>
    %1 = vector.multi_reduction <maximumf>, %0, %cst [1] : vector<8x32xf32> to vector<8xf32>
    %2 = vector.shape_cast %1 : vector<8xf32> to vector<8x1xf32>
    %3 = vector.broadcast %2 : vector<8x1xf32> to vector<8x32xf32>
    %4 = arith.subf %0, %3 : vector<8x32xf32>
    %5 = math.exp %4 : vector<8x32xf32>
    %cst_1 = arith.constant dense<0.000000e+00> : vector<8xf32>
    %6 = vector.multi_reduction <add>, %5, %cst_1 [1] : vector<8x32xf32> to vector<8xf32>
    %7 = vector.shape_cast %6 : vector<8xf32> to vector<8x1xf32>
    %8 = math.log %7 : vector<8x1xf32>
    %c0_2 = arith.constant 0 : index
    %c0_3 = arith.constant 0 : index
    %9 = vector.load %arg2[%c0_2, %c0_3] : memref<8x1xi32, #tpu.memory_space<vmem>>, vector<8x1xi32>
    %c0_4 = arith.constant 0 : index
    %c0_5 = arith.constant 0 : index
    %10 = vector.load %arg3[%c0_4, %c0_5] : memref<8x1xf32, #tpu.memory_space<vmem>>, vector<8x1xf32>
    %11 = tpu.iota {dimensions = array<i32: 1>} : vector<8x32xi32>
    %cst_6 = arith.constant dense<0.000000e+00> : vector<8xf32>
    %12 = vector.multi_reduction <add>, %0, %cst_6 [1] : vector<8x32xf32> to vector<8xf32>
    %13 = vector.shape_cast %12 : vector<8xf32> to vector<8x1xf32>
    %14 = vector.broadcast %9 : vector<8x1xi32> to vector<8x32xi32>
    %15 = arith.cmpi eq, %11, %14 : vector<8x32xi32>
    %cst_7 = arith.constant 0.000000e+00 : f32
    %16 = vector.broadcast %cst_7 : f32 to vector<8x32xf32>
    %17 = arith.select %15, %0, %16 : vector<8x32xi1>, vector<8x32xf32>
    %cst_8 = arith.constant dense<0.000000e+00> : vector<8xf32>
    %18 = vector.multi_reduction <add>, %17, %cst_8 [1] : vector<8x32xf32> to vector<8xf32>
    %19 = vector.shape_cast %18 : vector<8xf32> to vector<8x1xf32>
    %cst_9 = arith.constant 1.000000e+00 : f32
    %20 = vector.broadcast %cst_9 : f32 to vector<8x1xf32>
    %21 = arith.subf %20, %10 : vector<8x1xf32>
    %cst_10 = arith.constant 3.125000e-02 : f32
    %22 = vector.broadcast %cst_10 : f32 to vector<8x1xf32>
    %23 = arith.mulf %21, %22 : vector<8x1xf32>
    %24 = arith.mulf %23, %13 : vector<8x1xf32>
    %25 = arith.mulf %10, %19 : vector<8x1xf32>
    %26 = arith.addf %24, %25 : vector<8x1xf32>
    %27 = arith.addf %2, %8 : vector<8x1xf32>
    %28 = arith.subf %27, %26 : vector<8x1xf32>
    %c8_i32 = arith.constant 8 : i32
    %29 = arith.muli %arg0, %c8_i32 : i32
    %30 = tpu.iota {dimensions = array<i32: 0>} : vector<8x1xi32>
    %31 = vector.broadcast %29 : i32 to vector<8x1xi32>
    %32 = arith.addi %31, %30 : vector<8x1xi32>
    %c8_i32_11 = arith.constant 8 : i32
    %33 = vector.broadcast %c8_i32_11 : i32 to vector<8x1xi32>
    %34 = arith.cmpi slt, %32, %33 : vector<8x1xi32>
    %cst_12 = arith.constant 0.000000e+00 : f32
    %35 = vector.broadcast %cst_12 : f32 to vector<8x1xf32>
    %36 = arith.select %34, %28, %35 : vector<8x1xi1>, vector<8x1xf32>
    %37 = vector.shape_cast %36 : vector<8x1xf32> to vector<1x8x1xf32>
    %cst_13 = arith.constant dense<0.000000e+00> : vector<1xf32>
    %38 = vector.multi_reduction <add>, %37, %cst_13 [1, 2] : vector<1x8x1xf32> to vector<1xf32>
    %39 = vector.shape_cast %38 : vector<1xf32> to vector<1x1x1xf32>
    %40 = vector.extract %39[0, 0, 0] : f32 from vector<1x1x1xf32>
    %41 = tpu.iota {dimensions = array<i32: 0>} : vector<8x1xi32>
    %c0_i32 = arith.constant 0 : i32
    %42 = vector.broadcast %c0_i32 : i32 to vector<8x1xi32>
    %43 = arith.cmpi eq, %41, %42 : vector<8x1xi32>
    %cst_14 = arith.constant 0.000000e+00 : f32
    %44 = vector.broadcast %40 : f32 to vector<8x1xf32>
    %45 = vector.broadcast %cst_14 : f32 to vector<8x1xf32>
    %46 = arith.select %43, %44, %45 : vector<8x1xi1>, vector<8x1xf32>
    %c0_15 = arith.constant 0 : index
    %c0_16 = arith.constant 0 : index
    %47 = vector.load %arg4[%c0_15, %c0_16] : memref<8x1xf32, #tpu.memory_space<vmem>>, vector<8x1xf32>
    tpu.vector_store %arg4[%c0_15, %c0_16], %46 {strides = array<i32>} : memref<8x1xf32, #tpu.memory_space<vmem>>, vector<8x1xf32>,
    return
  }
  func.func @transform_0(%arg0: i32) -> (i32, i32) {
    %c0_i32 = arith.constant 0 : i32
    %c0_i32_0 = arith.constant 0 : i32
    return %arg0, %c0_i32 : i32, i32
  }
  func.func @transform_1(%arg0: i32) -> (i32, i32) {
    %c0_i32 = arith.constant 0 : i32
    %c0_i32_0 = arith.constant 0 : i32
    return %arg0, %c0_i32 : i32, i32
  }
  func.func @transform_2(%arg0: i32) -> (i32, i32) {
    %c0_i32 = arith.constant 0 : i32
    %c0_i32_0 = arith.constant 0 : i32
    return %arg0, %c0_i32 : i32, i32
  }
  func.func @transform_3(%arg0: i32) -> (i32, i32) {
    %c0_i32 = arith.constant 0 : i32
    %c0_i32_0 = arith.constant 0 : i32
    return %arg0, %c0_i32 : i32, i32
  }
}

</mosaic_0001>

<llo_original>
// kernel: tpu_custom_call.1
$region0: #{tpu_custom_call.1}
  #allocation0 [shape = 'u32[]', space=smem, size = 0x4, offset = 0x4, fixed_abs, tag = 'smem constant byte address 0x4 - core index']
  #allocation1 [shape = 'u32[144,128]{1,0:T(1,128)}', space=vmem, size = 0x12000, scoped, tag = 'internal scratch']
  %s0 = inlined_call_operand.vmem [shape: f32[8,32], index: 0, kind: input, shape index: {}]
  %s1 = inlined_call_operand.vmem [shape: s32[8,1], index: 1, kind: input, shape index: {}]
  %s2 = inlined_call_operand.vmem [shape: f32[8,1], index: 2, kind: input, shape index: {}]
  %s3 = inlined_call_operand.vmem [shape: f32[8,1], index: 3, kind: output, shape index: {}]
  %s4 = sld [smem:[#allocation0]]
  $region22: #{tpu_custom_call.1} parent=0
    _
  %s6 = ssub.s32 1, %s4
  %s7 = scalar_select 0, %s6, %s4
  // Predicated region
  $region2: #{tpu_custom_call.1} parent=0 // pred_check
    _
  $region3: #{tpu_custom_call.1} parent=0 // pred_check_branch
    %9 = sbr.rel (0) target = $region5
  $region4: #{tpu_custom_call.1} parent=0 // pred_region
    _
  $region5: #{tpu_custom_call.1} parent=0 // pred_fallthru
    _
  // Predicated region
  $region6: #{tpu_custom_call.1} parent=0 // pred_check
    _
  $region7: #{tpu_custom_call.1} parent=0 // pred_check_branch
    %11 = sbr.rel (0) target = $region9
  $region8: #{tpu_custom_call.1} parent=0 // pred_region
    _
  $region9: #{tpu_custom_call.1} parent=0 // pred_fallthru
    _
  // Predicated region
  $region10: #{tpu_custom_call.1} parent=0 // pred_check
    _
  $region11: #{tpu_custom_call.1} parent=0 // pred_check_branch
    %13 = sbr.rel (0) target = $region13
  $region12: #{tpu_custom_call.1} parent=0 // pred_region
    _
  $region13: #{tpu_custom_call.1} parent=0 // pred_fallthru
    _
  %v14 = vld [vmem:[%s0] sm:$0xff]
  %vm15 = vcmask 261120
  %v16 = vsel %vm15, %v14, -inf
  %17 = vmax.xlane.f32.xlu0 %v16
  %v18 = vpop.xlane.xlu0 %17
  %v19 = vsub.f32 %v14, %v18
  %v20 = vmul.f32 %v19, 1.442695
  %v21 = vpow.pop %v20
  %v22 = vsel %vm15, %v21, 0.0
  %23 = vadd.xlane.f32.xlu0 %v22
  %v24 = vpop.xlane.xlu0 %23
  %v25 = vlog2.pop %v24
  %v26 = vmul.f32 %v25, 0.6931472
  %v27 = vld [vmem:[%s1] sm:$0xff]
  %v28 = vld [vmem:[%s2] sm:$0xff]
  %v29 = vlaneseq
  %v30 = vand.u32 %v29, 127
  %v31 = vsel %vm15, %v14, 0.0
  %32 = vadd.xlane.f32.xlu0 %v31
  %v33 = vpop.xlane.xlu0 %32
  %34 = vset.pattern.permute.xlu0 0
  %35 = vperm.xlu0 %34, %v27
  %v36 = vpop.permute.xlu0 %35
  %vm37 = vcmp.eq.s32.totalorder %v30, %v36
  %v38 = vsel %vm37, %v14, 0.0
  %v39 = vsel %vm15, %v38, 0.0
  %40 = vadd.xlane.f32.xlu0 %v39
  %v41 = vpop.xlane.xlu0 %40
  %v42 = vsub.f32 1.0, %v28
  %v43 = vmul.f32 %v42, 0.03125
  %v44 = vmul.f32 %v43, %v33
  %v45 = vmul.f32 %v28, %v41
  %v46 = vadd.f32 %v44, %v45
  %v47 = vadd.f32 %v18, %v26
  %v48 = vsub.f32 %v47, %v46
  %s49 = smul.u32 0, 8
  %v50 = vlaneseq
  %v51 = vshrl.u32 %v50, 7
  %v52 = vstv %s49
  %v53 = vadd.s32 %v52, %v51
  %vm54 = vcmp.lt.s32.totalorder %v53, 8
  %v55 = vsel %vm54, %v48, 0.0
  %vm56 = vcmask 7168
  %v57 = vsel %vm56, %v55, 0.0
  %58 = vadd.xlane.f32.xlu0 %v57
  %v59 = vpop.xlane.xlu0 %58
  %v60 = vrot.slane %v59, 4
  %v61 = vadd.f32 %v59, %v60
  %v62 = vrot.slane %v61, 2
  %v63 = vadd.f32 %v61, %v62
  %v64 = vrot.slane %v63, 1
  %v65 = vadd.f32 %v63, %v64
  %s66 = vtos %v65
  %vm67 = vcmp.eq.s32.totalorder %v51, 0
  %v68 = vstv %s66
  %v69 = vsel %vm67, %v68, 0.0
  %70 = vst.msk [vmem:[%s3] sm:$0xff] %vm56, %v69
  // Predicated region
  $region14: #{tpu_custom_call.1} parent=0 // pred_check
    _
  $region15: #{tpu_custom_call.1} parent=0 // pred_check_branch
    %72 = sbr.rel (0) target = $region17
  $region16: #{tpu_custom_call.1} parent=0 // pred_region
    _
  $region17: #{tpu_custom_call.1} parent=0 // pred_fallthru
    _
  // Predicated region
  $region18: #{tpu_custom_call.1} parent=0 // pred_check
    _
  $region19: #{tpu_custom_call.1} parent=0 // pred_check_branch
    %74 = sbr.rel (0) target = $region21
  $region20: #{tpu_custom_call.1} parent=0 // pred_region
    _
  $region21: #{tpu_custom_call.1} parent=0 // pred_fallthru
    _

</llo_original>
